<compile_context>
chip_gen: v7x
topology: tpu7x:2x2x1
jax: 0.10.0
libtpu: 0.0.40
codegen_flags: <defaults>
</compile_context>

<pallas_src>
from typing import NamedTuple

import jax
import jax.numpy as jnp
from jax.experimental import pallas as pl
from jax.experimental.pallas import tpu as pltpu


def _round_up(n, m):
    return ((n + m - 1) // m) * m


def _vmem_limit_bytes():
    """~3/4 of physical VMEM: ~96 MiB on v5e/v6e (128 MiB), ~48 MiB on v7x (64 MiB)."""
    try:
        cap = int(pltpu.get_tpu_info().vmem_capacity_bytes)
    except Exception:
        cap = 64 << 20  # conservative fallback (v7x per-TC VMEM)
    return max(32 << 20, min((cap * 3) // 4, 112 << 20))


class FFNNParams(NamedTuple):
    w1p: jax.Array  # (I_p, H_p) bf16, zero-padded
    b1p: jax.Array  # (1, H_p)   f32
    w2p: jax.Array  # (H_p, O_p) bf16, zero-padded
    b2p: jax.Array  # (H_p -> O_p) bias, (1, O_p) f32
    dims: tuple     # (I, H, O) logical sizes


def prepare_ffnn_params(w1, b1, w2, b2, *, matmul_dtype=jnp.bfloat16):
    """One-time pad + cast of the weights (hoisted out of the forward path).

    w1: (I, H), b1: (1, H), w2: (H, O), b2: (1, O).  Zero padding is exact:
    padded hidden units see zero weights/bias and feed zero w2 rows; padded
    output columns are sliced off by ffnn_forward.
    """
    I, H = w1.shape
    O = w2.shape[1]
    I_p = _round_up(I, 128)
    # v6e/v7x MXUs are 2x256x256: use 256-aligned tiles once H/O are big enough
    # to be MXU-bound; v5e's 128x128 MXU is native at 128 either way.
    H_p = _round_up(H, 256 if H >= 256 else 128)
    O_p = _round_up(O, 256 if O >= 256 else 128)

    w1p = jnp.zeros((I_p, H_p), matmul_dtype).at[:I, :H].set(w1.astype(matmul_dtype))
    b1p = jnp.zeros((1, H_p), jnp.float32).at[:, :H].set(b1.astype(jnp.float32))
    w2p = jnp.zeros((H_p, O_p), matmul_dtype).at[:H, :O].set(w2.astype(matmul_dtype))
    b2p = jnp.zeros((1, O_p), jnp.float32).at[:, :O].set(b2.astype(jnp.float32))
    return FFNNParams(w1p, b1p, w2p, b2p, (I, H, O))


def ffnn_kernel(x_ref, w1_ref, b1_ref, w2_ref, b2_ref, o_ref):
    # fc1: (TB, I) @ (I, H) on the MXU; cast x to the matmul dtype in-kernel so
    # it streams from HBM only once, in its original dtype.
    x = x_ref[...].astype(w1_ref.dtype)
    h = jnp.dot(x, w1_ref[...], preferred_element_type=jnp.float32)
    h = h + b1_ref[...]                       # (1, H) f32 bias broadcast
    # sigmoid(h) = 0.5 * (1 + tanh(0.5 * h)): single EUP op per element; the
    # mul/add ride free in the VALU slots.  Exact (no approx-reciprocal).
    h = 0.5 * (1.0 + jnp.tanh(0.5 * h))
    # fc2: (TB, H) @ (H, O) on the MXU with f32 accumulation.
    out = jnp.dot(h.astype(w2_ref.dtype), w2_ref[...],
                  preferred_element_type=jnp.float32)
    out = out + b2_ref[...]
    o_ref[...] = out.astype(o_ref.dtype)


def _make_specs(TB, I_p, H_p, O_p, single_buffer_weights):
    if single_buffer_weights:
        resident = dict(pipeline_mode=pl.Buffered(1))   # no useless double-buffer
    else:
        resident = {}
    in_specs = [
        pl.BlockSpec((TB, I_p), lambda i: (i, 0)),              # x: streamed
        pl.BlockSpec((I_p, H_p), lambda i: (0, 0), **resident),  # w1: resident
        pl.BlockSpec((1, H_p), lambda i: (0, 0), **resident),    # b1: resident
        pl.BlockSpec((H_p, O_p), lambda i: (0, 0), **resident),  # w2: resident
        pl.BlockSpec((1, O_p), lambda i: (0, 0), **resident),    # b2: resident
    ]
    out_spec = pl.BlockSpec((TB, O_p), lambda i: (i, 0))
    return in_specs, out_spec


def ffnn_forward(x, params: FFNNParams, *, block_batch=512):
    """x: (B, I) -> (B, O), same dtype as x.  params from prepare_ffnn_params."""
    B, I = x.shape
    I_log, H, O = params.dims
    assert I == I_log, f"x feature dim {I} != weight input dim {I_log}"
    I_p, H_p = params.w1p.shape
    O_p = params.w2p.shape[1]

    # Batch tile: multiple of 16 (dense bf16 vreg packing).
    TB = max(16, min(_round_up(B, 16), _round_up(block_batch, 16)))
    # Give the "parallel" batch axis >= 2 tiles when possible so v7x's two
    # TensorCores both get work (negligible cost on single-TC v5e/v6e).
    B16 = _round_up(B, 16)
    if B16 >= 32:
        TB = min(TB, _round_up((B16 + 1) // 2, 16))
    B_p = _round_up(B, TB)

    # Only repack x if padding is actually required; keep its original dtype
    # (the bf16 cast happens inside the kernel) to avoid an extra HBM pass.
    if (B_p, I_p) != (B, I):
        xp = jnp.zeros((B_p, I_p), x.dtype).at[:B, :I].set(x)
    else:
        xp = x

    def _run(single_buffer_weights):
        in_specs, out_spec = _make_specs(TB, I_p, H_p, O_p, single_buffer_weights)
        return pl.pallas_call(
            ffnn_kernel,
            out_shape=jax.ShapeDtypeStruct((B_p, O_p), x.dtype),
            grid_spec=pltpu.PrefetchScalarGridSpec(
                num_scalar_prefetch=0,
                grid=(B_p // TB,),
                in_specs=in_specs,
                out_specs=out_spec,
            ),
            compiler_params=pltpu.CompilerParams(
                dimension_semantics=("parallel",),      # batch tiles independent
                vmem_limit_bytes=_vmem_limit_bytes(),   # generation-aware
            ),
        )(xp, params.w1p, params.b1p, params.w2p, params.b2p)

    try:
        out_padded = _run(single_buffer_weights=True)
    except Exception:
        # Fallback for runtimes without pipeline_mode=pl.Buffered support.
        out_padded = _run(single_buffer_weights=False)

    if (B_p, O_p) != (B, O):
        return out_padded[:B, :O]
    return out_padded


def init_ffnn_params(key, num_input, num_hidden, num_output, dtype=jnp.float32):
    """Deterministic init mirroring nn.Linear's U(-1/sqrt(fan_in), 1/sqrt(fan_in)).

    Weights stored as (in, out) so the kernel computes x @ W without transpose.
    """
    k1, k2, k3, k4 = jax.random.split(key, 4)
    bound1 = 1.0 / jnp.sqrt(num_input)
    bound2 = 1.0 / jnp.sqrt(num_hidden)
    w1 = jax.random.uniform(k1, (num_input, num_hidden), dtype, -bound1, bound1)
    b1 = jax.random.uniform(k2, (1, num_hidden), dtype, -bound1, bound1)
    w2 = jax.random.uniform(k3, (num_hidden, num_output), dtype, -bound2, bound2)
    b2 = jax.random.uniform(k4, (1, num_output), dtype, -bound2, bound2)
    return w1, b1, w2, b2


def ffnn_reference(x, w1, b1, w2, b2):
    h = x @ w1 + b1
    h = 1.0 / (1.0 + jnp.exp(-h))
    return h @ w2 + b2


if __name__ == "__main__":
    batch, num_input, num_hidden, num_output = 8, 32, 32, 16

    key = jax.random.PRNGKey(0)
    kx, kp = jax.random.split(key)
    x = jax.random.normal(kx, (batch, num_input), jnp.float32)
    w1, b1, w2, b2 = init_ffnn_params(kp, num_input, num_hidden, num_output)

    # Weight padding/cast is done once here (steady-state forward calls reuse it).
    params = prepare_ffnn_params(w1, b1, w2, b2)

    out = ffnn_forward(x, params)
    out = jax.block_until_ready(out)

    ref = ffnn_reference(x, w1, b1, w2, b2)
    assert out.shape == (batch, num_output)
    # bf16 MXU operands vs exact f32 reference (sigmoid itself is exact now).
    assert jnp.allclose(out, ref, atol=2e-2, rtol=2e-2)

    print("KERNEL_OK")
</pallas_src>

<mosaic_0001>
module attributes {stable_mosaic.version = 11 : i64} {
  func.func @ffnn_kernel(%arg0: i32, %arg1: memref<16x128xf32, #tpu.memory_space<vmem>>, %arg2: memref<128x128xbf16, #tpu.memory_space<vmem>>, %arg3: memref<1x128xf32, #tpu.memory_space<vmem>>, %arg4: memref<128x128xbf16, #tpu.memory_space<vmem>>, %arg5: memref<1x128xf32, #tpu.memory_space<vmem>>, %arg6: memref<16x128xf32, #tpu.memory_space<vmem>>) attributes {dimension_semantics = [#tpu.dimension_semantics<parallel>], iteration_bounds = array<i64: 1>, scalar_prefetch = 0 : i64, scratch_operands = 0 : i64, tpu.core_type = #tpu.core_type<tc>, window_params = [{transform_indices = @transform_0, window_bounds = array<i64: 16, 128>}, {pipeline_mode = #tpu.pipeline_mode<synchronous>, transform_indices = @transform_1, window_bounds = array<i64: 128, 128>}, {pipeline_mode = #tpu.pipeline_mode<synchronous>, transform_indices = @transform_2, window_bounds = array<i64: 1, 128>}, {pipeline_mode = #tpu.pipeline_mode<synchronous>, transform_indices = @transform_3, window_bounds = array<i64: 128, 128>}, {pipeline_mode = #tpu.pipeline_mode<synchronous>, transform_indices = @transform_4, window_bounds = array<i64: 1, 128>}, {transform_indices = @transform_5, window_bounds = array<i64: 16, 128>}]} {
    %c0 = arith.constant 0 : index
    %c0_0 = arith.constant 0 : index
    %0 = vector.load %arg1[%c0, %c0_0] : memref<16x128xf32, #tpu.memory_space<vmem>>, vector<16x128xf32>
    %1 = arith.truncf %0 : vector<16x128xf32> to vector<16x128xbf16>
    %c0_1 = arith.constant 0 : index
    %c0_2 = arith.constant 0 : index
    %2 = vector.load %arg2[%c0_1, %c0_2] : memref<128x128xbf16, #tpu.memory_space<vmem>>, vector<128x128xbf16>
    %cst = arith.constant dense<0.000000e+00> : vector<16x128xf32>
    %3 = tpu.matmul %1, %2, %cst {dimension_numbers = #tpu.dot_dimension_numbers<[1], [0], [0], [1], [0, 0, 1, 1], [], []>} : vector<16x128xbf16>, vector<128x128xbf16>, vector<16x128xf32> -> vector<16x128xf32>
    %c0_3 = arith.constant 0 : index
    %c0_4 = arith.constant 0 : index
    %4 = vector.load %arg3[%c0_3, %c0_4] : memref<1x128xf32, #tpu.memory_space<vmem>>, vector<1x128xf32>
    %5 = vector.broadcast %4 : vector<1x128xf32> to vector<16x128xf32>
    %6 = arith.addf %3, %5 : vector<16x128xf32>
    %cst_5 = arith.constant 5.000000e-01 : f32
    %7 = vector.broadcast %cst_5 : f32 to vector<16x128xf32>
    %8 = arith.mulf %7, %6 : vector<16x128xf32>
    %9 = math.tanh %8 : vector<16x128xf32>
    %cst_6 = arith.constant 1.000000e+00 : f32
    %10 = vector.broadcast %cst_6 : f32 to vector<16x128xf32>
    %11 = arith.addf %10, %9 : vector<16x128xf32>
    %cst_7 = arith.constant 5.000000e-01 : f32
    %12 = vector.broadcast %cst_7 : f32 to vector<16x128xf32>
    %13 = arith.mulf %12, %11 : vector<16x128xf32>
    %14 = arith.truncf %13 : vector<16x128xf32> to vector<16x128xbf16>
    %c0_8 = arith.constant 0 : index
    %c0_9 = arith.constant 0 : index
    %15 = vector.load %arg4[%c0_8, %c0_9] : memref<128x128xbf16, #tpu.memory_space<vmem>>, vector<128x128xbf16>
    %cst_10 = arith.constant dense<0.000000e+00> : vector<16x128xf32>
    %16 = tpu.matmul %14, %15, %cst_10 {dimension_numbers = #tpu.dot_dimension_numbers<[1], [0], [0], [1], [0, 0, 1, 1], [], []>} : vector<16x128xbf16>, vector<128x128xbf16>, vector<16x128xf32> -> vector<16x128xf32>
    %c0_11 = arith.constant 0 : index
    %c0_12 = arith.constant 0 : index
    %17 = vector.load %arg5[%c0_11, %c0_12] : memref<1x128xf32, #tpu.memory_space<vmem>>, vector<1x128xf32>
    %18 = vector.broadcast %17 : vector<1x128xf32> to vector<16x128xf32>
    %19 = arith.addf %16, %18 : vector<16x128xf32>
    %c0_13 = arith.constant 0 : index
    %c0_14 = arith.constant 0 : index
    %20 = vector.load %arg6[%c0_13, %c0_14] : memref<16x128xf32, #tpu.memory_space<vmem>>, vector<16x128xf32>
    tpu.vector_store %arg6[%c0_13, %c0_14], %19 {strides = array<i32>} : memref<16x128xf32, #tpu.memory_space<vmem>>, vector<16x128xf32>,
    return
  }
  func.func @transform_0(%arg0: i32) -> (i32, i32) {
    %c0_i32 = arith.constant 0 : i32
    %c0_i32_0 = arith.constant 0 : i32
    return %arg0, %c0_i32 : i32, i32
  }
  func.func @transform_1(%arg0: i32) -> (i32, i32) {
    %c0_i32 = arith.constant 0 : i32
    %c0_i32_0 = arith.constant 0 : i32
    %c0_i32_1 = arith.constant 0 : i32
    return %c0_i32, %c0_i32_0 : i32, i32
  }
  func.func @transform_2(%arg0: i32) -> (i32, i32) {
    %c0_i32 = arith.constant 0 : i32
    %c0_i32_0 = arith.constant 0 : i32
    %c0_i32_1 = arith.constant 0 : i32
    return %c0_i32, %c0_i32_0 : i32, i32
  }
  func.func @transform_3(%arg0: i32) -> (i32, i32) {
    %c0_i32 = arith.constant 0 : i32
    %c0_i32_0 = arith.constant 0 : i32
    %c0_i32_1 = arith.constant 0 : i32
    return %c0_i32, %c0_i32_0 : i32, i32
  }
  func.func @transform_4(%arg0: i32) -> (i32, i32) {
    %c0_i32 = arith.constant 0 : i32
    %c0_i32_0 = arith.constant 0 : i32
    %c0_i32_1 = arith.constant 0 : i32
    return %c0_i32, %c0_i32_0 : i32, i32
  }
  func.func @transform_5(%arg0: i32) -> (i32, i32) {
    %c0_i32 = arith.constant 0 : i32
    %c0_i32_0 = arith.constant 0 : i32
    return %arg0, %c0_i32 : i32, i32
  }
}

module attributes {stable_mosaic.version = 11 : i64} {
  func.func @ffnn_kernel(%arg0: i32, %arg1: memref<16x128xf32, #tpu.memory_space<vmem>>, %arg2: memref<128x128xbf16, #tpu.memory_space<vmem>>, %arg3: memref<1x128xf32, #tpu.memory_space<vmem>>, %arg4: memref<128x128xbf16, #tpu.memory_space<vmem>>, %arg5: memref<1x128xf32, #tpu.memory_space<vmem>>, %arg6: memref<16x128xf32, #tpu.memory_space<vmem>>) attributes {dimension_semantics = [#tpu.dimension_semantics<parallel>], iteration_bounds = array<i64: 1>, scalar_prefetch = 0 : i64, scratch_operands = 0 : i64, tpu.core_type = #tpu.core_type<tc>, window_params = [{transform_indices = @transform_0, window_bounds = array<i64: 16, 128>}, {pipeline_mode = #tpu.pipeline_mode<synchronous>, transform_indices = @transform_1, window_bounds = array<i64: 128, 128>}, {pipeline_mode = #tpu.pipeline_mode<synchronous>, transform_indices = @transform_2, window_bounds = array<i64: 1, 128>}, {pipeline_mode = #tpu.pipeline_mode<synchronous>, transform_indices = @transform_3, window_bounds = array<i64: 128, 128>}, {pipeline_mode = #tpu.pipeline_mode<synchronous>, transform_indices = @transform_4, window_bounds = array<i64: 1, 128>}, {transform_indices = @transform_5, window_bounds = array<i64: 16, 128>}]} {
    %c0 = arith.constant 0 : index
    %c0_0 = arith.constant 0 : index
    %0 = vector.load %arg1[%c0, %c0_0] : memref<16x128xf32, #tpu.memory_space<vmem>>, vector<16x128xf32>
    %1 = arith.truncf %0 : vector<16x128xf32> to vector<16x128xbf16>
    %c0_1 = arith.constant 0 : index
    %c0_2 = arith.constant 0 : index
    %2 = vector.load %arg2[%c0_1, %c0_2] : memref<128x128xbf16, #tpu.memory_space<vmem>>, vector<128x128xbf16>
    %cst = arith.constant dense<0.000000e+00> : vector<16x128xf32>
    %3 = tpu.matmul %1, %2, %cst {dimension_numbers = #tpu.dot_dimension_numbers<[1], [0], [0], [1], [0, 0, 1, 1], [], []>} : vector<16x128xbf16>, vector<128x128xbf16>, vector<16x128xf32> -> vector<16x128xf32>
    %c0_3 = arith.constant 0 : index
    %c0_4 = arith.constant 0 : index
    %4 = vector.load %arg3[%c0_3, %c0_4] : memref<1x128xf32, #tpu.memory_space<vmem>>, vector<1x128xf32>
    %5 = vector.broadcast %4 : vector<1x128xf32> to vector<16x128xf32>
    %6 = arith.addf %3, %5 : vector<16x128xf32>
    %cst_5 = arith.constant 5.000000e-01 : f32
    %7 = vector.broadcast %cst_5 : f32 to vector<16x128xf32>
    %8 = arith.mulf %7, %6 : vector<16x128xf32>
    %9 = math.tanh %8 : vector<16x128xf32>
    %cst_6 = arith.constant 1.000000e+00 : f32
    %10 = vector.broadcast %cst_6 : f32 to vector<16x128xf32>
    %11 = arith.addf %10, %9 : vector<16x128xf32>
    %cst_7 = arith.constant 5.000000e-01 : f32
    %12 = vector.broadcast %cst_7 : f32 to vector<16x128xf32>
    %13 = arith.mulf %12, %11 : vector<16x128xf32>
    %14 = arith.truncf %13 : vector<16x128xf32> to vector<16x128xbf16>
    %c0_8 = arith.constant 0 : index
    %c0_9 = arith.constant 0 : index
    %15 = vector.load %arg4[%c0_8, %c0_9] : memref<128x128xbf16, #tpu.memory_space<vmem>>, vector<128x128xbf16>
    %cst_10 = arith.constant dense<0.000000e+00> : vector<16x128xf32>
    %16 = tpu.matmul %14, %15, %cst_10 {dimension_numbers = #tpu.dot_dimension_numbers<[1], [0], [0], [1], [0, 0, 1, 1], [], []>} : vector<16x128xbf16>, vector<128x128xbf16>, vector<16x128xf32> -> vector<16x128xf32>
    %c0_11 = arith.constant 0 : index
    %c0_12 = arith.constant 0 : index
    %17 = vector.load %arg5[%c0_11, %c0_12] : memref<1x128xf32, #tpu.memory_space<vmem>>, vector<1x128xf32>
    %18 = vector.broadcast %17 : vector<1x128xf32> to vector<16x128xf32>
    %19 = arith.addf %16, %18 : vector<16x128xf32>
    %c0_13 = arith.constant 0 : index
    %c0_14 = arith.constant 0 : index
    %20 = vector.load %arg6[%c0_13, %c0_14] : memref<16x128xf32, #tpu.memory_space<vmem>>, vector<16x128xf32>
    tpu.vector_store %arg6[%c0_13, %c0_14], %19 {strides = array<i32>} : memref<16x128xf32, #tpu.memory_space<vmem>>, vector<16x128xf32>,
    return
  }
  func.func @transform_0(%arg0: i32) -> (i32, i32) {
    %c0_i32 = arith.constant 0 : i32
    %c0_i32_0 = arith.constant 0 : i32
    return %arg0, %c0_i32 : i32, i32
  }
  func.func @transform_1(%arg0: i32) -> (i32, i32) {
    %c0_i32 = arith.constant 0 : i32
    %c0_i32_0 = arith.constant 0 : i32
    %c0_i32_1 = arith.constant 0 : i32
    return %c0_i32, %c0_i32_0 : i32, i32
  }
  func.func @transform_2(%arg0: i32) -> (i32, i32) {
    %c0_i32 = arith.constant 0 : i32
    %c0_i32_0 = arith.constant 0 : i32
    %c0_i32_1 = arith.constant 0 : i32
    return %c0_i32, %c0_i32_0 : i32, i32
  }
  func.func @transform_3(%arg0: i32) -> (i32, i32) {
    %c0_i32 = arith.constant 0 : i32
    %c0_i32_0 = arith.constant 0 : i32
    %c0_i32_1 = arith.constant 0 : i32
    return %c0_i32, %c0_i32_0 : i32, i32
  }
  func.func @transform_4(%arg0: i32) -> (i32, i32) {
    %c0_i32 = arith.constant 0 : i32
    %c0_i32_0 = arith.constant 0 : i32
    %c0_i32_1 = arith.constant 0 : i32
    return %c0_i32, %c0_i32_0 : i32, i32
  }
  func.func @transform_5(%arg0: i32) -> (i32, i32) {
    %c0_i32 = arith.constant 0 : i32
    %c0_i32_0 = arith.constant 0 : i32
    return %arg0, %c0_i32 : i32, i32
  }
}

</mosaic_0001>

<llo_original>
// kernel: tpu_custom_call.1
$region0: #{tpu_custom_call.1}
  #allocation0 [shape = 'u32[]', space=smem, size = 0x4, offset = 0x4, fixed_abs, tag = 'smem constant byte address 0x4 - core index']
  #allocation1 [shape = 'u32[144,128]{1,0:T(1,128)}', space=vmem, size = 0x12000, scoped, tag = 'internal scratch']
  %s0 = inlined_call_operand.hbm [shape: f32[16,128], index: 0, kind: input, shape index: {}]
  %s1 = inlined_call_operand.hbm [shape: bf16[128,128], index: 1, kind: input, shape index: {}]
  %s2 = inlined_call_operand.vmem [shape: f32[1,128], index: 2, kind: input, shape index: {}]
  %s3 = inlined_call_operand.hbm [shape: bf16[128,128], index: 3, kind: input, shape index: {}]
  %s4 = inlined_call_operand.vmem [shape: f32[1,128], index: 4, kind: input, shape index: {}]
  %s5 = inlined_call_operand.hbm [shape: f32[16,128], index: 5, kind: output, shape index: {}]
  %s6 = sld [smem:[#allocation0]]
  $region42: #{tpu_custom_call.1} parent=0
    _
  %s8 = ssub.s32 1, %s6
  %s9 = scalar_select 0, %s8, %s6
  $region1: #{tpu_custom_call.1} parent=0
    #allocation2 [shape = 'u8[8192]{0}', space=vmem, size = 0x2000, scoped, tag = 'input window, operand 0, single buffered']
    #allocation3 [shape = 's32[1]{0}', space=sflag, size = 0x4, scoped, tag = 'scoped memory for tpu_custom_call.1']
    #allocation4 [shape = 's32[1]{0}', space=sflag, size = 0x4, scoped, tag = 'scoped memory for tpu_custom_call.1']
    #allocation5 [shape = 'u8[32768]{0}', space=vmem, size = 0x8000, scoped, tag = 'input window, operand 1, single buffered']
    #allocation6 [shape = 's32[1]{0}', space=sflag, size = 0x4, scoped, tag = 'scoped memory for tpu_custom_call.1']
    #allocation7 [shape = 'u8[32768]{0}', space=vmem, size = 0x8000, scoped, tag = 'input window, operand 3, single buffered']
    #allocation8 [shape = 'u8[8192]{0}', space=vmem, size = 0x2000, scoped, tag = 'output window, operand 0, single buffered']
    %10 = vsyncpa [#allocation3], 0
    %11 = vsyncpa [#allocation6], 0
    %12 = vsyncpa [#allocation4], 0
    // Predicated region
    $region2: #{tpu_custom_call.1} parent=1 // pred_check
      _
    $region3: #{tpu_custom_call.1} parent=1 // pred_check_branch
      %14 = sbr.rel (0) target = $region5
    $region4: #{tpu_custom_call.1} parent=1 // pred_region
      %s16 = ssub.s32 256, 256
      %17 = vsyncadd [#allocation3], %s16
      %s18 = sshll.u32 [#allocation2], 4
      %s19 = int_to_ptr.vmem [resolvable:$true] %s18
      %24 = dma.hbm_to_vmem [thread:$0]  %s0, 256, %s19, [#allocation3], 128, 128, 8
    $region5: #{tpu_custom_call.1} parent=1 // pred_fallthru
      _
    // Predicated region
    $region6: #{tpu_custom_call.1} parent=1 // pred_check
      _
    $region7: #{tpu_custom_call.1} parent=1 // pred_check_branch
      %26 = sbr.rel (0) target = $region9
    $region8: #{tpu_custom_call.1} parent=1 // pred_region
      %s28 = ssub.s32 1024, 1024
      %29 = vsyncadd [#allocation6], %s28
      %s30 = sshll.u32 [#allocation5], 4
      %s31 = int_to_ptr.vmem [resolvable:$true] %s30
      %36 = dma.hbm_to_vmem [thread:$0]  %s1, 1024, %s31, [#allocation6], 64, 64, 4
    $region9: #{tpu_custom_call.1} parent=1 // pred_fallthru
      _
    // Predicated region
    $region10: #{tpu_custom_call.1} parent=1 // pred_check
      _
    $region11: #{tpu_custom_call.1} parent=1 // pred_check_branch
      %38 = sbr.rel (0) target = $region13
    $region12: #{tpu_custom_call.1} parent=1 // pred_region
      _
    $region13: #{tpu_custom_call.1} parent=1 // pred_fallthru
      _
    // Predicated region
    $region14: #{tpu_custom_call.1} parent=1 // pred_check
      _
    $region15: #{tpu_custom_call.1} parent=1 // pred_check_branch
      %40 = sbr.rel (0) target = $region17
    $region16: #{tpu_custom_call.1} parent=1 // pred_region
      %s42 = ssub.s32 1024, 1024
      %43 = vsyncadd [#allocation6], %s42
      %s44 = sshll.u32 [#allocation7], 4
      %s45 = int_to_ptr.vmem [resolvable:$true] %s44
      %50 = dma.hbm_to_vmem [thread:$0]  %s3, 1024, %s45, [#allocation6], 64, 64, 4
    $region17: #{tpu_custom_call.1} parent=1 // pred_fallthru
      _
    // Predicated region
    $region18: #{tpu_custom_call.1} parent=1 // pred_check
      _
    $region19: #{tpu_custom_call.1} parent=1 // pred_check_branch
      %52 = sbr.rel (0) target = $region21
    $region20: #{tpu_custom_call.1} parent=1 // pred_region
      _
    $region21: #{tpu_custom_call.1} parent=1 // pred_fallthru
      _
    // Predicated region
    $region22: #{tpu_custom_call.1} parent=1 // pred_check
      _
    $region23: #{tpu_custom_call.1} parent=1 // pred_check_branch
      %54 = sbr.rel (0) target = $region25
    $region24: #{tpu_custom_call.1} parent=1 // pred_region
      %55 = dma.done [#allocation3], 256
    $region25: #{tpu_custom_call.1} parent=1 // pred_fallthru
      _
    // Predicated region
    $region26: #{tpu_custom_call.1} parent=1 // pred_check
      _
    $region27: #{tpu_custom_call.1} parent=1 // pred_check_branch
      %57 = sbr.rel (0) target = $region29
    $region28: #{tpu_custom_call.1} parent=1 // pred_region
      %58 = dma.done [#allocation6], 1024
    $region29: #{tpu_custom_call.1} parent=1 // pred_fallthru
      _
    // Predicated region
    $region30: #{tpu_custom_call.1} parent=1 // pred_check
      _
    $region31: #{tpu_custom_call.1} parent=1 // pred_check_branch
      %60 = sbr.rel (0) target = $region33
    $region32: #{tpu_custom_call.1} parent=1 // pred_region
      %61 = dma.done [#allocation6], 1024
    $region33: #{tpu_custom_call.1} parent=1 // pred_fallthru
      _
    %v63 = vld [vmem:[#allocation2] sm:$0xff]
    %v64 = vld [vmem:[#allocation2 + $0x8] sm:$0xff]
    %v65 = vpack.c.bf16 %v64, %v63
    %v66 = vld [vmem:[#allocation5] sm:$0xf]
    %v67 = vld [vmem:[#allocation5 + $0x4] sm:$0xf]
    %v68 = vld [vmem:[#allocation5 + $0x8] sm:$0xf]
    %v69 = vld [vmem:[#allocation5 + $0xc] sm:$0xf]
    %v70 = vld [vmem:[#allocation5 + $0x10] sm:$0xf]
    %v71 = vld [vmem:[#allocation5 + $0x14] sm:$0xf]
    %v72 = vld [vmem:[#allocation5 + $0x18] sm:$0xf]
    %v73 = vld [vmem:[#allocation5 + $0x1c] sm:$0xf]
    %v74 = vld [vmem:[#allocation5 + $0x20] sm:$0xf]
    %v75 = vld [vmem:[#allocation5 + $0x24] sm:$0xf]
    %v76 = vld [vmem:[#allocation5 + $0x28] sm:$0xf]
    %v77 = vld [vmem:[#allocation5 + $0x2c] sm:$0xf]
    %v78 = vld [vmem:[#allocation5 + $0x30] sm:$0xf]
    %v79 = vld [vmem:[#allocation5 + $0x34] sm:$0xf]
    %v80 = vld [vmem:[#allocation5 + $0x38] sm:$0xf]
    %v81 = vld [vmem:[#allocation5 + $0x3c] sm:$0xf]
    %v82 = vld [vmem:[%s2] sm:$0x1]
    %v84 = vlaneseq
    %v85 = vshrl.u32 %v84, 7
    %v86 = vsub.s32 0, %v85
    %v87 = vrot.slane %v82, %v86
    %v105 = vunpack.c.l.b16 %v66
    %v106 = vunpack.c.l.b16 %v67
    %v107 = vunpack.c.l.b16 %v68
    %v108 = vunpack.c.l.b16 %v69
    %v109 = vunpack.c.l.b16 %v70
    %v110 = vunpack.c.l.b16 %v71
    %v111 = vunpack.c.l.b16 %v72
    %v112 = vunpack.c.l.b16 %v73
    %v113 = vunpack.c.l.b16 %v74
    %v114 = vunpack.c.l.b16 %v75
    %v115 = vunpack.c.l.b16 %v76
    %v116 = vunpack.c.l.b16 %v77
    %v117 = vunpack.c.l.b16 %v78
    %v118 = vunpack.c.l.b16 %v79
    %v119 = vunpack.c.l.b16 %v80
    %v120 = vunpack.c.l.b16 %v81
    %v121 = vpack.c.b16 %v106, %v105
    %v122 = vpack.c.b16 %v108, %v107
    %v123 = vpack.c.b16 %v110, %v109
    %v124 = vpack.c.b16 %v112, %v111
    %v125 = vpack.c.b16 %v114, %v113
    %v126 = vpack.c.b16 %v116, %v115
    %v127 = vpack.c.b16 %v118, %v117
    %v128 = vpack.c.b16 %v120, %v119
    %137 = vmatprep.subr.bf16.mxu0 0
    %138 = vmatpush1.bf16.msra.mxu0 %v121
    %139 = vmatprep.subr.bf16.mxu0 0
    %140 = vmatpush1.bf16.msra.mxu0 %v122
    %141 = vmatprep.subr.bf16.mxu0 0
    %142 = vmatpush1.bf16.msra.mxu0 %v123
    %143 = vmatprep.subr.bf16.mxu0 0
    %144 = vmatpush1.bf16.msra.mxu0 %v124
    %145 = vmatprep.subr.bf16.mxu0 0
    %146 = vmatpush1.bf16.msra.mxu0 %v125
    %147 = vmatprep.subr.bf16.mxu0 0
    %148 = vmatpush1.bf16.msra.mxu0 %v126
    %149 = vmatprep.subr.bf16.mxu0 0
    %150 = vmatpush1.bf16.msra.mxu0 %v127
    %151 = vmatprep.subr.bf16.mxu0 0
    %152 = vmatpush1.bf16.msra.mxu0 %v128
    %153 = vmatprep.subr.bf16.mxu0 0
    %154 = vmatpush1.bf16.msra.mxu0 0
    %155 = vmatprep.subr.bf16.mxu0 0
    %156 = vmatpush1.bf16.msra.mxu0 0
    %157 = vmatprep.subr.bf16.mxu0 0
    %158 = vmatpush1.bf16.msra.mxu0 0
    %159 = vmatprep.subr.bf16.mxu0 0
    %160 = vmatpush1.bf16.msra.mxu0 0
    %161 = vmatprep.subr.bf16.mxu0 0
    %162 = vmatpush1.bf16.msra.mxu0 0
    %163 = vmatprep.subr.bf16.mxu0 0
    %164 = vmatpush1.bf16.msra.mxu0 0
    %165 = vmatprep.subr.bf16.mxu0 0
    %166 = vmatpush1.bf16.msra.mxu0 0
    %167 = vmatprep.subr.bf16.mxu0 0
    %168 = vmatpush1.bf16.msra.mxu0 0
    %169 = vmatprep.mubr.bf16.mxu0 0
    %170 = vmatmul.mubr.bf16.gmra.mrb[0].mxu0 %v65
    %v171 = vpop.f32.mrb[0].mxu0
    %v172 = vadd.f32 %v87, %v171
    %v173 = vpop.f32.mrb[0].mxu0
    %v174 = vpop.f32.mrb[0].mxu0
    %v175 = vadd.f32 %v87, %v174
    %v176 = vpop.f32.mrb[0].mxu0
    %177 = vdwg.mxu0
    %v178 = vmul.f32 %v172, 0.5
    %v179 = vmul.f32 %v175, 0.5
    %v180 = vtanh.pop %v178
    %v181 = vtanh.pop %v179
    %v182 = vadd.f32 %v180, 1.0
    %v183 = vadd.f32 %v181, 1.0
    %v184 = vmul.f32 %v182, 0.5
    %v185 = vmul.f32 %v183, 0.5
    %v186 = vpack.c.bf16 %v185, %v184
    %v187 = vld [vmem:[#allocation7] sm:$0xf]
    %v188 = vld [vmem:[#allocation7 + $0x4] sm:$0xf]
    %v189 = vld [vmem:[#allocation7 + $0x8] sm:$0xf]
    %v190 = vld [vmem:[#allocation7 + $0xc] sm:$0xf]
    %v191 = vld [vmem:[#allocation7 + $0x10] sm:$0xf]
    %v192 = vld [vmem:[#allocation7 + $0x14] sm:$0xf]
    %v193 = vld [vmem:[#allocation7 + $0x18] sm:$0xf]
    %v194 = vld [vmem:[#allocation7 + $0x1c] sm:$0xf]
    %v195 = vld [vmem:[#allocation7 + $0x20] sm:$0xf]
    %v196 = vld [vmem:[#allocation7 + $0x24] sm:$0xf]
    %v197 = vld [vmem:[#allocation7 + $0x28] sm:$0xf]
    %v198 = vld [vmem:[#allocation7 + $0x2c] sm:$0xf]
    %v199 = vld [vmem:[#allocation7 + $0x30] sm:$0xf]
    %v200 = vld [vmem:[#allocation7 + $0x34] sm:$0xf]
    %v201 = vld [vmem:[#allocation7 + $0x38] sm:$0xf]
    %v202 = vld [vmem:[#allocation7 + $0x3c] sm:$0xf]
    %v203 = vld [vmem:[%s4] sm:$0x1]
    %v205 = vlaneseq
    %v206 = vshrl.u32 %v205, 7
    %v207 = vsub.s32 0, %v206
    %v208 = vrot.slane %v203, %v207
    %v226 = vunpack.c.l.b16 %v187
    %v227 = vunpack.c.l.b16 %v188
    %v228 = vunpack.c.l.b16 %v189
    %v229 = vunpack.c.l.b16 %v190
    %v230 = vunpack.c.l.b16 %v191
    %v231 = vunpack.c.l.b16 %v192
    %v232 = vunpack.c.l.b16 %v193
    %v233 = vunpack.c.l.b16 %v194
    %v234 = vunpack.c.l.b16 %v195
    %v235 = vunpack.c.l.b16 %v196
    %v236 = vunpack.c.l.b16 %v197
    %v237 = vunpack.c.l.b16 %v198
    %v238 = vunpack.c.l.b16 %v199
    %v239 = vunpack.c.l.b16 %v200
    %v240 = vunpack.c.l.b16 %v201
    %v241 = vunpack.c.l.b16 %v202
    %v242 = vpack.c.b16 %v227, %v226
    %v243 = vpack.c.b16 %v229, %v228
    %v244 = vpack.c.b16 %v231, %v230
    %v245 = vpack.c.b16 %v233, %v232
    %v246 = vpack.c.b16 %v235, %v234
    %v247 = vpack.c.b16 %v237, %v236
    %v248 = vpack.c.b16 %v239, %v238
    %v249 = vpack.c.b16 %v241, %v240
    %258 = vmatprep.subr.bf16.mxu0 0
    %259 = vmatpush1.bf16.msra.mxu0 %v242
    %260 = vmatprep.subr.bf16.mxu0 0
    %261 = vmatpush1.bf16.msra.mxu0 %v243
    %262 = vmatprep.subr.bf16.mxu0 0
    %263 = vmatpush1.bf16.msra.mxu0 %v244
    %264 = vmatprep.subr.bf16.mxu0 0
    %265 = vmatpush1.bf16.msra.mxu0 %v245
    %266 = vmatprep.subr.bf16.mxu0 0
    %267 = vmatpush1.bf16.msra.mxu0 %v246
    %268 = vmatprep.subr.bf16.mxu0 0
    %269 = vmatpush1.bf16.msra.mxu0 %v247
    %270 = vmatprep.subr.bf16.mxu0 0
    %271 = vmatpush1.bf16.msra.mxu0 %v248
    %272 = vmatprep.subr.bf16.mxu0 0
    %273 = vmatpush1.bf16.msra.mxu0 %v249
    %274 = vmatprep.subr.bf16.mxu0 0
    %275 = vmatpush1.bf16.msra.mxu0 0
    %276 = vmatprep.subr.bf16.mxu0 0
    %277 = vmatpush1.bf16.msra.mxu0 0
    %278 = vmatprep.subr.bf16.mxu0 0
    %279 = vmatpush1.bf16.msra.mxu0 0
    %280 = vmatprep.subr.bf16.mxu0 0
    %281 = vmatpush1.bf16.msra.mxu0 0
    %282 = vmatprep.subr.bf16.mxu0 0
    %283 = vmatpush1.bf16.msra.mxu0 0
    %284 = vmatprep.subr.bf16.mxu0 0
    %285 = vmatpush1.bf16.msra.mxu0 0
    %286 = vmatprep.subr.bf16.mxu0 0
    %287 = vmatpush1.bf16.msra.mxu0 0
    %288 = vmatprep.subr.bf16.mxu0 0
    %289 = vmatpush1.bf16.msra.mxu0 0
    %290 = vmatprep.mubr.bf16.mxu0 0
    %291 = vmatmul.mubr.bf16.gmra.mrb[0].mxu0 %v186
    %v292 = vpop.f32.mrb[0].mxu0
    %v293 = vadd.f32 %v208, %v292
    %v294 = vpop.f32.mrb[0].mxu0
    %v295 = vpop.f32.mrb[0].mxu0
    %v296 = vadd.f32 %v208, %v295
    %v297 = vpop.f32.mrb[0].mxu0
    %298 = vdwg.mxu0
    %299 = vst [vmem:[#allocation8] sm:$0xff] %v293
    %300 = vst [vmem:[#allocation8 + $0x8] sm:$0xff] %v296
    // Predicated region
    $region34: #{tpu_custom_call.1} parent=1 // pred_check
      _
    $region35: #{tpu_custom_call.1} parent=1 // pred_check_branch
      %302 = sbr.rel (0) target = $region37
    $region36: #{tpu_custom_call.1} parent=1 // pred_region
      %s304 = ssub.s32 256, 256
      %305 = vsyncadd [#allocation4], %s304
      %s306 = sshll.u32 [#allocation8], 4
      %s307 = int_to_ptr.vmem [resolvable:$true] %s306
      %312 = dma.vmem_to_hbm [thread:$0]  %s307, 256, %s5, [#allocation4], 128, 128, 8
    $region37: #{tpu_custom_call.1} parent=1 // pred_fallthru
      _
    // Predicated region
    $region38: #{tpu_custom_call.1} parent=1 // pred_check
      _
    $region39: #{tpu_custom_call.1} parent=1 // pred_check_branch
      %314 = sbr.rel (0) target = $region41
    $region40: #{tpu_custom_call.1} parent=1 // pred_region
      %315 = dma.done [#allocation4], 256
    $region41: #{tpu_custom_call.1} parent=1 // pred_fallthru
      _
    %316 = vsyncpa [#allocation3], 1
    %317 = vsyncpa [#allocation6], 1
    %318 = vsyncpa [#allocation4], 1

// kernel: tpu_custom_call.1
$region0: #{tpu_custom_call.1}
  #allocation0 [shape = 'u32[]', space=smem, size = 0x4, offset = 0x4, fixed_abs, tag = 'smem constant byte address 0x4 - core index']
  #allocation1 [shape = 'u32[144,128]{1,0:T(1,128)}', space=vmem, size = 0x12000, scoped, tag = 'internal scratch']
  %s0 = inlined_call_operand.hbm [shape: f32[16,128], index: 0, kind: input, shape index: {}]
  %s1 = inlined_call_operand.hbm [shape: bf16[128,128], index: 1, kind: input, shape index: {}]
  %s2 = inlined_call_operand.vmem [shape: f32[1,128], index: 2, kind: input, shape index: {}]
  %s3 = inlined_call_operand.hbm [shape: bf16[128,128], index: 3, kind: input, shape index: {}]
  %s4 = inlined_call_operand.vmem [shape: f32[1,128], index: 4, kind: input, shape index: {}]
  %s5 = inlined_call_operand.hbm [shape: f32[16,128], index: 5, kind: output, shape index: {}]
  %s6 = sld [smem:[#allocation0]]
  $region42: #{tpu_custom_call.1} parent=0
    _
  %s8 = ssub.s32 1, %s6
  %s9 = scalar_select 0, %s8, %s6
  $region1: #{tpu_custom_call.1} parent=0
    #allocation2 [shape = 'u8[8192]{0}', space=vmem, size = 0x2000, scoped, tag = 'input window, operand 0, single buffered']
    #allocation3 [shape = 's32[1]{0}', space=sflag, size = 0x4, scoped, tag = 'scoped memory for tpu_custom_call.1']
    #allocation4 [shape = 's32[1]{0}', space=sflag, size = 0x4, scoped, tag = 'scoped memory for tpu_custom_call.1']
    #allocation5 [shape = 'u8[32768]{0}', space=vmem, size = 0x8000, scoped, tag = 'input window, operand 1, single buffered']
    #allocation6 [shape = 's32[1]{0}', space=sflag, size = 0x4, scoped, tag = 'scoped memory for tpu_custom_call.1']
    #allocation7 [shape = 'u8[32768]{0}', space=vmem, size = 0x8000, scoped, tag = 'input window, operand 3, single buffered']
    #allocation8 [shape = 'u8[8192]{0}', space=vmem, size = 0x2000, scoped, tag = 'output window, operand 0, single buffered']
    %10 = vsyncpa [#allocation3], 0
    %11 = vsyncpa [#allocation6], 0
    %12 = vsyncpa [#allocation4], 0
    // Predicated region
    $region2: #{tpu_custom_call.1} parent=1 // pred_check
      _
    $region3: #{tpu_custom_call.1} parent=1 // pred_check_branch
      %14 = sbr.rel (0) target = $region5
    $region4: #{tpu_custom_call.1} parent=1 // pred_region
      %s16 = ssub.s32 256, 256
      %17 = vsyncadd [#allocation3], %s16
      %s18 = sshll.u32 [#allocation2], 4
      %s19 = int_to_ptr.vmem [resolvable:$true] %s18
      %24 = dma.hbm_to_vmem [thread:$0]  %s0, 256, %s19, [#allocation3], 128, 128, 8
    $region5: #{tpu_custom_call.1} parent=1 // pred_fallthru
      _
    // Predicated region
    $region6: #{tpu_custom_call.1} parent=1 // pred_check
      _
    $region7: #{tpu_custom_call.1} parent=1 // pred_check_branch
      %26 = sbr.rel (0) target = $region9
    $region8: #{tpu_custom_call.1} parent=1 // pred_region
      %s28 = ssub.s32 1024, 1024
      %29 = vsyncadd [#allocation6], %s28
      %s30 = sshll.u32 [#allocation5], 4
      %s31 = int_to_ptr.vmem [resolvable:$true] %s30
      %36 = dma.hbm_to_vmem [thread:$0]  %s1, 1024, %s31, [#allocation6], 64, 64, 4
    $region9: #{tpu_custom_call.1} parent=1 // pred_fallthru
      _
    // Predicated region
    $region10: #{tpu_custom_call.1} parent=1 // pred_check
      _
    $region11: #{tpu_custom_call.1} parent=1 // pred_check_branch
      %38 = sbr.rel (0) target = $region13
    $region12: #{tpu_custom_call.1} parent=1 // pred_region
      _
    $region13: #{tpu_custom_call.1} parent=1 // pred_fallthru
      _
    // Predicated region
    $region14: #{tpu_custom_call.1} parent=1 // pred_check
      _
    $region15: #{tpu_custom_call.1} parent=1 // pred_check_branch
      %40 = sbr.rel (0) target = $region17
    $region16: #{tpu_custom_call.1} parent=1 // pred_region
      %s42 = ssub.s32 1024, 1024
      %43 = vsyncadd [#allocation6], %s42
      %s44 = sshll.u32 [#allocation7], 4
      %s45 = int_to_ptr.vmem [resolvable:$true] %s44
      %50 = dma.hbm_to_vmem [thread:$0]  %s3, 1024, %s45, [#allocation6], 64, 64, 4
    $region17: #{tpu_custom_call.1} parent=1 // pred_fallthru
      _
    // Predicated region
    $region18: #{tpu_custom_call.1} parent=1 // pred_check
      _
    $region19: #{tpu_custom_call.1} parent=1 // pred_check_branch
      %52 = sbr.rel (0) target = $region21
    $region20: #{tpu_custom_call.1} parent=1 // pred_region
      _
    $region21: #{tpu_custom_call.1} parent=1 // pred_fallthru
      _
    // Predicated region
    $region22: #{tpu_custom_call.1} parent=1 // pred_check
      _
    $region23: #{tpu_custom_call.1} parent=1 // pred_check_branch
      %54 = sbr.rel (0) target = $region25
    $region24: #{tpu_custom_call.1} parent=1 // pred_region
      %55 = dma.done [#allocation3], 256
    $region25: #{tpu_custom_call.1} parent=1 // pred_fallthru
      _
    // Predicated region
    $region26: #{tpu_custom_call.1} parent=1 // pred_check
      _
    $region27: #{tpu_custom_call.1} parent=1 // pred_check_branch
      %57 = sbr.rel (0) target = $region29
    $region28: #{tpu_custom_call.1} parent=1 // pred_region
      %58 = dma.done [#allocation6], 1024
    $region29: #{tpu_custom_call.1} parent=1 // pred_fallthru
      _
    // Predicated region
    $region30: #{tpu_custom_call.1} parent=1 // pred_check
      _
    $region31: #{tpu_custom_call.1} parent=1 // pred_check_branch
      %60 = sbr.rel (0) target = $region33
    $region32: #{tpu_custom_call.1} parent=1 // pred_region
      %61 = dma.done [#allocation6], 1024
    $region33: #{tpu_custom_call.1} parent=1 // pred_fallthru
      _
    %v63 = vld [vmem:[#allocation2] sm:$0xff]
    %v64 = vld [vmem:[#allocation2 + $0x8] sm:$0xff]
    %v65 = vpack.c.bf16 %v64, %v63
    %v66 = vld [vmem:[#allocation5] sm:$0xf]
    %v67 = vld [vmem:[#allocation5 + $0x4] sm:$0xf]
    %v68 = vld [vmem:[#allocation5 + $0x8] sm:$0xf]
    %v69 = vld [vmem:[#allocation5 + $0xc] sm:$0xf]
    %v70 = vld [vmem:[#allocation5 + $0x10] sm:$0xf]
    %v71 = vld [vmem:[#allocation5 + $0x14] sm:$0xf]
    %v72 = vld [vmem:[#allocation5 + $0x18] sm:$0xf]
    %v73 = vld [vmem:[#allocation5 + $0x1c] sm:$0xf]
    %v74 = vld [vmem:[#allocation5 + $0x20] sm:$0xf]
    %v75 = vld [vmem:[#allocation5 + $0x24] sm:$0xf]
    %v76 = vld [vmem:[#allocation5 + $0x28] sm:$0xf]
    %v77 = vld [vmem:[#allocation5 + $0x2c] sm:$0xf]
    %v78 = vld [vmem:[#allocation5 + $0x30] sm:$0xf]
    %v79 = vld [vmem:[#allocation5 + $0x34] sm:$0xf]
    %v80 = vld [vmem:[#allocation5 + $0x38] sm:$0xf]
    %v81 = vld [vmem:[#allocation5 + $0x3c] sm:$0xf]
    %v82 = vld [vmem:[%s2] sm:$0x1]
    %v84 = vlaneseq
    %v85 = vshrl.u32 %v84, 7
    %v86 = vsub.s32 0, %v85
    %v87 = vrot.slane %v82, %v86
    %v105 = vunpack.c.l.b16 %v66
    %v106 = vunpack.c.l.b16 %v67
    %v107 = vunpack.c.l.b16 %v68
    %v108 = vunpack.c.l.b16 %v69
    %v109 = vunpack.c.l.b16 %v70
    %v110 = vunpack.c.l.b16 %v71
    %v111 = vunpack.c.l.b16 %v72
    %v112 = vunpack.c.l.b16 %v73
    %v113 = vunpack.c.l.b16 %v74
    %v114 = vunpack.c.l.b16 %v75
    %v115 = vunpack.c.l.b16 %v76
    %v116 = vunpack.c.l.b16 %v77
    %v117 = vunpack.c.l.b16 %v78
    %v118 = vunpack.c.l.b16 %v79
    %v119 = vunpack.c.l.b16 %v80
    %v120 = vunpack.c.l.b16 %v81
    %v121 = vpack.c.b16 %v106, %v105
    %v122 = vpack.c.b16 %v108, %v107
    %v123 = vpack.c.b16 %v110, %v109
    %v124 = vpack.c.b16 %v112, %v111
    %v125 = vpack.c.b16 %v114, %v113
    %v126 = vpack.c.b16 %v116, %v115
    %v127 = vpack.c.b16 %v118, %v117
    %v128 = vpack.c.b16 %v120, %v119
    %137 = vmatprep.subr.bf16.mxu0 0
    %138 = vmatpush1.bf16.msra.mxu0 %v121
    %139 = vmatprep.subr.bf16.mxu0 0
    %140 = vmatpush1.bf16.msra.mxu0 %v122
    %141 = vmatprep.subr.bf16.mxu0 0
    %142 = vmatpush1.bf16.msra.mxu0 %v123
    %143 = vmatprep.subr.bf16.mxu0 0
    %144 = vmatpush1.bf16.msra.mxu0 %v124
    %145 = vmatprep.subr.bf16.mxu0 0
    %146 = vmatpush1.bf16.msra.mxu0 %v125
    %147 = vmatprep.subr.bf16.mxu0 0
    %148 = vmatpush1.bf16.msra.mxu0 %v126
    %149 = vmatprep.subr.bf16.mxu0 0
    %150 = vmatpush1.bf16.msra.mxu0 %v127
    %151 = vmatprep.subr.bf16.mxu0 0
    %152 = vmatpush1.bf16.msra.mxu0 %v128
    %153 = vmatprep.subr.bf16.mxu0 0
    %154 = vmatpush1.bf16.msra.mxu0 0
    %155 = vmatprep.subr.bf16.mxu0 0
    %156 = vmatpush1.bf16.msra.mxu0 0
    %157 = vmatprep.subr.bf16.mxu0 0
    %158 = vmatpush1.bf16.msra.mxu0 0
    %159 = vmatprep.subr.bf16.mxu0 0
    %160 = vmatpush1.bf16.msra.mxu0 0
    %161 = vmatprep.subr.bf16.mxu0 0
    %162 = vmatpush1.bf16.msra.mxu0 0
    %163 = vmatprep.subr.bf16.mxu0 0
    %164 = vmatpush1.bf16.msra.mxu0 0
    %165 = vmatprep.subr.bf16.mxu0 0
    %166 = vmatpush1.bf16.msra.mxu0 0
    %167 = vmatprep.subr.bf16.mxu0 0
    %168 = vmatpush1.bf16.msra.mxu0 0
    %169 = vmatprep.mubr.bf16.mxu0 0
    %170 = vmatmul.mubr.bf16.gmra.mrb[0].mxu0 %v65
    %v171 = vpop.f32.mrb[0].mxu0
    %v172 = vadd.f32 %v87, %v171
    %v173 = vpop.f32.mrb[0].mxu0
    %v174 = vpop.f32.mrb[0].mxu0
    %v175 = vadd.f32 %v87, %v174
    %v176 = vpop.f32.mrb[0].mxu0
    %177 = vdwg.mxu0
    %v178 = vmul.f32 %v172, 0.5
    %v179 = vmul.f32 %v175, 0.5
    %v180 = vtanh.pop %v178
    %v181 = vtanh.pop %v179
    %v182 = vadd.f32 %v180, 1.0
    %v183 = vadd.f32 %v181, 1.0
    %v184 = vmul.f32 %v182, 0.5
    %v185 = vmul.f32 %v183, 0.5
    %v186 = vpack.c.bf16 %v185, %v184
    %v187 = vld [vmem:[#allocation7] sm:$0xf]
    %v188 = vld [vmem:[#allocation7 + $0x4] sm:$0xf]
    %v189 = vld [vmem:[#allocation7 + $0x8] sm:$0xf]
    %v190 = vld [vmem:[#allocation7 + $0xc] sm:$0xf]
    %v191 = vld [vmem:[#allocation7 + $0x10] sm:$0xf]
    %v192 = vld [vmem:[#allocation7 + $0x14] sm:$0xf]
    %v193 = vld [vmem:[#allocation7 + $0x18] sm:$0xf]
    %v194 = vld [vmem:[#allocation7 + $0x1c] sm:$0xf]
    %v195 = vld [vmem:[#allocation7 + $0x20] sm:$0xf]
    %v196 = vld [vmem:[#allocation7 + $0x24] sm:$0xf]
    %v197 = vld [vmem:[#allocation7 + $0x28] sm:$0xf]
    %v198 = vld [vmem:[#allocation7 + $0x2c] sm:$0xf]
    %v199 = vld [vmem:[#allocation7 + $0x30] sm:$0xf]
    %v200 = vld [vmem:[#allocation7 + $0x34] sm:$0xf]
    %v201 = vld [vmem:[#allocation7 + $0x38] sm:$0xf]
    %v202 = vld [vmem:[#allocation7 + $0x3c] sm:$0xf]
    %v203 = vld [vmem:[%s4] sm:$0x1]
    %v205 = vlaneseq
    %v206 = vshrl.u32 %v205, 7
    %v207 = vsub.s32 0, %v206
    %v208 = vrot.slane %v203, %v207
    %v226 = vunpack.c.l.b16 %v187
    %v227 = vunpack.c.l.b16 %v188
    %v228 = vunpack.c.l.b16 %v189
    %v229 = vunpack.c.l.b16 %v190
    %v230 = vunpack.c.l.b16 %v191
    %v231 = vunpack.c.l.b16 %v192
    %v232 = vunpack.c.l.b16 %v193
    %v233 = vunpack.c.l.b16 %v194
    %v234 = vunpack.c.l.b16 %v195
    %v235 = vunpack.c.l.b16 %v196
    %v236 = vunpack.c.l.b16 %v197
    %v237 = vunpack.c.l.b16 %v198
    %v238 = vunpack.c.l.b16 %v199
    %v239 = vunpack.c.l.b16 %v200
    %v240 = vunpack.c.l.b16 %v201
    %v241 = vunpack.c.l.b16 %v202
    %v242 = vpack.c.b16 %v227, %v226
    %v243 = vpack.c.b16 %v229, %v228
    %v244 = vpack.c.b16 %v231, %v230
    %v245 = vpack.c.b16 %v233, %v232
    %v246 = vpack.c.b16 %v235, %v234
    %v247 = vpack.c.b16 %v237, %v236
    %v248 = vpack.c.b16 %v239, %v238
    %v249 = vpack.c.b16 %v241, %v240
    %258 = vmatprep.subr.bf16.mxu0 0
    %259 = vmatpush1.bf16.msra.mxu0 %v242
    %260 = vmatprep.subr.bf16.mxu0 0
    %261 = vmatpush1.bf16.msra.mxu0 %v243
    %262 = vmatprep.subr.bf16.mxu0 0
    %263 = vmatpush1.bf16.msra.mxu0 %v244
    %264 = vmatprep.subr.bf16.mxu0 0
    %265 = vmatpush1.bf16.msra.mxu0 %v245
    %266 = vmatprep.subr.bf16.mxu0 0
    %267 = vmatpush1.bf16.msra.mxu0 %v246
    %268 = vmatprep.subr.bf16.mxu0 0
    %269 = vmatpush1.bf16.msra.mxu0 %v247
    %270 = vmatprep.subr.bf16.mxu0 0
    %271 = vmatpush1.bf16.msra.mxu0 %v248
    %272 = vmatprep.subr.bf16.mxu0 0
    %273 = vmatpush1.bf16.msra.mxu0 %v249
    %274 = vmatprep.subr.bf16.mxu0 0
    %275 = vmatpush1.bf16.msra.mxu0 0
    %276 = vmatprep.subr.bf16.mxu0 0
    %277 = vmatpush1.bf16.msra.mxu0 0
    %278 = vmatprep.subr.bf16.mxu0 0
    %279 = vmatpush1.bf16.msra.mxu0 0
    %280 = vmatprep.subr.bf16.mxu0 0
    %281 = vmatpush1.bf16.msra.mxu0 0
    %282 = vmatprep.subr.bf16.mxu0 0
    %283 = vmatpush1.bf16.msra.mxu0 0
    %284 = vmatprep.subr.bf16.mxu0 0
    %285 = vmatpush1.bf16.msra.mxu0 0
    %286 = vmatprep.subr.bf16.mxu0 0
    %287 = vmatpush1.bf16.msra.mxu0 0
    %288 = vmatprep.subr.bf16.mxu0 0
    %289 = vmatpush1.bf16.msra.mxu0 0
    %290 = vmatprep.mubr.bf16.mxu0 0
    %291 = vmatmul.mubr.bf16.gmra.mrb[0].mxu0 %v186
    %v292 = vpop.f32.mrb[0].mxu0
    %v293 = vadd.f32 %v208, %v292
    %v294 = vpop.f32.mrb[0].mxu0
    %v295 = vpop.f32.mrb[0].mxu0
    %v296 = vadd.f32 %v208, %v295
    %v297 = vpop.f32.mrb[0].mxu0
    %298 = vdwg.mxu0
    %299 = vst [vmem:[#allocation8] sm:$0xff] %v293
    %300 = vst [vmem:[#allocation8 + $0x8] sm:$0xff] %v296
    // Predicated region
    $region34: #{tpu_custom_call.1} parent=1 // pred_check
      _
    $region35: #{tpu_custom_call.1} parent=1 // pred_check_branch
      %302 = sbr.rel (0) target = $region37
    $region36: #{tpu_custom_call.1} parent=1 // pred_region
      %s304 = ssub.s32 256, 256
      %305 = vsyncadd [#allocation4], %s304
      %s306 = sshll.u32 [#allocation8], 4
      %s307 = int_to_ptr.vmem [resolvable:$true] %s306
      %312 = dma.vmem_to_hbm [thread:$0]  %s307, 256, %s5, [#allocation4], 128, 128, 8
    $region37: #{tpu_custom_call.1} parent=1 // pred_fallthru
      _
    // Predicated region
    $region38: #{tpu_custom_call.1} parent=1 // pred_check
      _
    $region39: #{tpu_custom_call.1} parent=1 // pred_check_branch
      %314 = sbr.rel (0) target = $region41
    $region40: #{tpu_custom_call.1} parent=1 // pred_region
      %315 = dma.done [#allocation4], 256
    $region41: #{tpu_custom_call.1} parent=1 // pred_fallthru
      _
    %316 = vsyncpa [#allocation3], 1
    %317 = vsyncpa [#allocation6], 1
    %318 = vsyncpa [#allocation4], 1

</llo_original>
